<compile_context>
chip_gen: v5e
topology: v5e:2x2
jax: 0.10.0
libtpu: 0.0.40
codegen_flags: <defaults>
</compile_context>

<pallas_src>
import functools

import jax
import jax.numpy as jnp
from jax import lax
from jax.experimental import pallas as pl
from jax.experimental.pallas import tpu as pltpu

EPS = 1e-5  # torch.nn.GroupNorm default eps


def _sa_kernel(p_ref, x_ref, o_ref):
    """One grid step = (tb, 2, tr) independent channel rows of length HW.

    Unified per-row gate (A/B/C precomputed on host side):
        arg = A * rsqrt(var + eps) * (x - mu) + B * mu + C
    Channel-attention rows:  A = 0,               B = cweight, C = cbias
    Spatial-attention rows:  A = gn_w * sweight,  B = 0,       C = gn_b*sweight + sbias
    """
    x = x_ref[...]                                   # (tb, 2, tr, hw)
    hw = x.shape[-1]
    xf = x.astype(jnp.float32)                       # stats / math always in f32

    p = p_ref[...]                                   # (3, 2, tr, 1) f32
    A, B, C = p[0], p[1], p[2]                       # (2, tr, 1)

    # Single-pass statistics: var = E[x^2] - mu^2 (clamped for cancellation).
    mu = jnp.mean(xf, axis=-1, keepdims=True)        # (tb, 2, tr, 1)
    ex2 = jnp.mean(xf * xf, axis=-1, keepdims=True)
    var = jnp.maximum(ex2 - mu * mu, 0.0)
    rs = lax.rsqrt(var + EPS)                        # EUP

    # Fold into a per-row affine:  arg = alpha*x + beta.
    alpha = A * rs                                   # 0 for channel-attn rows
    beta = (B - alpha) * mu + C
    arg = alpha * xf + beta
    gate = 0.5 * jnp.tanh(0.5 * arg) + 0.5           # == sigmoid(arg), 1 EUP op
    res = (xf * gate).astype(o_ref.dtype)            # (tb, 2, tr, hw)

    # Fused channel_shuffle(2): out row j = [half0 | half1] along lanes, so the
    # caller's row-major reshape (b, c/2, 2*hw) -> (b, c, h, w) IS the shuffle.
    o_ref[:, :, :hw] = res[:, 0]
    o_ref[:, :, hw:] = res[:, 1]
    # TODO(synk): when HW % 128 != 0 the second store is lane-misaligned and
    # relies on Mosaic's masked-store lowering (not exercised by the test below).


def _gen_cfg():
    """(target block bytes, scoped-VMEM cap); conservative if HW query fails."""
    vmem_cap = 64 << 20
    try:
        vmem_cap = int(pltpu.get_tpu_info().vmem_capacity_bytes)
    except Exception:
        pass
    if vmem_cap >= (100 << 20):          # v5e / v6e: 128 MiB physical VMEM
        return 8 << 20, 96 << 20
    return 6 << 20, 48 << 20             # v7x-class: 64 MiB per TensorCore


def _choose_tiles(b, c_half, hw, itemsize, target_bytes):
    """Pick (tb batch rows, tr channel-half rows); one block = tb*2*tr*hw elems."""
    pair_bytes = 2 * hw * itemsize       # one (i=0,1) channel pair, one sample

    # tr: largest multiple-of-8 (or full-extent) divisor of c_half that fits.
    tr_opts = sorted([c_half] + [d for d in range(8, c_half, 8) if c_half % d == 0])
    tr = tr_opts[0]
    for d in tr_opts:
        if d * pair_bytes <= target_bytes:
            tr = max(tr, d)

    # tb: largest divisor of b keeping the block under target.
    tb = 1
    for d in range(1, b + 1):
        if b % d == 0 and d * tr * pair_bytes <= target_bytes:
            tb = d

    # Keep >= 2 grid steps when possible (pipelining / v7x megacore sharding).
    def steps(_tb, _tr):
        return (b // _tb) * (c_half // _tr)

    while steps(tb, tr) < 2 and tb > 1:
        tb = max(d for d in range(1, tb) if b % d == 0)
    if steps(tb, tr) < 2:
        smaller = [d for d in tr_opts if d < tr]
        if smaller:
            tr = smaller[-1]
    return tb, tr


def sa_layer_pallas(x, params, groups):
    """x: (B, C, H, W), params: (6, C//(2*groups), 1)
       [cweight, cbias, sweight, sbias, gn_weight, gn_bias]."""
    b, c, h, w = x.shape
    cg = c // groups
    cg2 = cg // 2
    c_half = c // 2
    hw = h * w
    dtype = x.dtype
    itemsize = jnp.dtype(dtype).itemsize

    cw, cb, sw, sb, gw, gb = (params[i, :, 0] for i in range(6))   # (cg2,)

    # Per-channel unified gate parameters, stacked into ONE array (one DMA).
    k = jnp.arange(c) % cg
    is_chan = k < cg2
    idx_c = jnp.where(is_chan, k, 0)
    idx_s = jnp.where(is_chan, 0, k - cg2)
    A = jnp.where(is_chan, 0.0, gw[idx_s] * sw[idx_s])
    B = jnp.where(is_chan, cw[idx_c], 0.0)
    C = jnp.where(is_chan, cb[idx_c], gb[idx_s] * sw[idx_s] + sb[idx_s])
    # channel index ch = i*c_half + j  ->  (i, j)
    P = jnp.stack([A, B, C]).astype(jnp.float32).reshape(3, 2, c_half, 1)

    x4 = x.reshape(b, 2, c_half, hw)                 # free reshape

    target_bytes, vmem_cap = _gen_cfg()
    tb, tr = _choose_tiles(b, c_half, hw, itemsize, target_bytes)
    grid = (c_half // tr, b // tb)                   # channel blocks slow, batch fast

    # VMEM budget: double-buffered in + out blocks, plus ~2 f32 block temporaries.
    block_in = tb * 2 * tr * hw * itemsize
    need = 4 * block_in + 2 * (tb * 2 * tr * hw * 4) + (2 << 20)
    vmem_limit = int(min(vmem_cap, max(32 << 20, need)))

    p_spec = pl.BlockSpec((3, 2, tr, 1), lambda jb, bb: (0, 0, jb, 0))
    x_spec = pl.BlockSpec((tb, 2, tr, hw), lambda jb, bb: (bb, 0, jb, 0))
    o_spec = pl.BlockSpec((tb, tr, 2 * hw), lambda jb, bb: (bb, jb, 0))

    out = pl.pallas_call(
        _sa_kernel,
        out_shape=jax.ShapeDtypeStruct((b, c_half, 2 * hw), dtype),
        grid_spec=pltpu.PrefetchScalarGridSpec(
            num_scalar_prefetch=0,
            grid=grid,
            in_specs=[p_spec, x_spec],
            out_specs=o_spec,
        ),
        compiler_params=pltpu.CompilerParams(
            dimension_semantics=("parallel", "parallel"),
            vmem_limit_bytes=vmem_limit,
        ),
    )(P, x4)

    # Row-major reshape realizes channel_shuffle(2): final channel m = 2*j + i.
    return out.reshape(b, c, h, w)


def sa_layer_ref(x, params, groups):
    """Pure-JAX reference mirroring the PyTorch forward."""
    b, c, h, w = x.shape
    cg2 = c // (2 * groups)
    cw, cb, sw, sb, gw, gb = [params[i].reshape(1, cg2, 1, 1) for i in range(6)]
    xr = x.reshape(b * groups, c // groups, h, w)
    x0, x1 = xr[:, :cg2], xr[:, cg2:]

    xn = jnp.mean(x0, axis=(2, 3), keepdims=True)
    xn = cw * xn + cb
    xn = x0 * jax.nn.sigmoid(xn)

    mu = jnp.mean(x1, axis=(2, 3), keepdims=True)
    var = jnp.mean(jnp.square(x1 - mu), axis=(2, 3), keepdims=True)
    xs = (x1 - mu) / jnp.sqrt(var + EPS)
    xs = xs * gw + gb
    xs = sw * xs + sb
    xs = x1 * jax.nn.sigmoid(xs)

    out = jnp.concatenate([xn, xs], axis=1).reshape(b, c, h, w)
    out = out.reshape(b, 2, c // 2, h, w).transpose(0, 2, 1, 3, 4).reshape(b, c, h, w)
    return out


if __name__ == "__main__":
    # Small, consistent shapes: channel must be divisible by 2*groups.
    B, C, H, W = 2, 16, 16, 16
    GROUPS = 2
    CG2 = C // (2 * GROUPS)

    key = jax.random.PRNGKey(0)
    kx, kp = jax.random.split(key)
    x = jax.random.normal(kx, (B, C, H, W), dtype=jnp.float32)

    # Deterministic parameters (perturbed around the module's __init__ values:
    # cweight/sweight = 0, cbias/sbias = 1, gn.weight = 1, gn.bias = 0).
    pk = jax.random.normal(kp, (6, CG2, 1), dtype=jnp.float32) * 0.1
    init = jnp.array([0.0, 1.0, 0.0, 1.0, 1.0, 0.0],
                     dtype=jnp.float32).reshape(6, 1, 1)
    params = init + pk   # (6, CG2, 1)

    fn = jax.jit(functools.partial(sa_layer_pallas, groups=GROUPS))
    out = jax.block_until_ready(fn(x, params))

    ref = sa_layer_ref(x, params, GROUPS)
    assert out.shape == (B, C, H, W)
    assert jnp.allclose(out, ref, atol=1e-5, rtol=1e-5), "mismatch vs reference"

    print("KERNEL_OK")
</pallas_src>

<mosaic_0001>
module attributes {stable_mosaic.version = 11 : i64} {
  func.func @_sa_kernel(%arg0: i32, %arg1: i32, %arg2: memref<3x2x8x1xf32, #tpu.memory_space<vmem>>, %arg3: memref<1x2x8x256xf32, #tpu.memory_space<vmem>>, %arg4: memref<1x8x512xf32, #tpu.memory_space<vmem>>) attributes {dimension_semantics = [#tpu.dimension_semantics<parallel>, #tpu.dimension_semantics<parallel>], iteration_bounds = array<i64: 1, 2>, scalar_prefetch = 0 : i64, scratch_operands = 0 : i64, tpu.core_type = #tpu.core_type<tc>, window_params = [{transform_indices = @transform_0, window_bounds = array<i64: 3, 2, 8, 1>}, {transform_indices = @transform_1, window_bounds = array<i64: 1, 2, 8, 256>}, {transform_indices = @transform_2, window_bounds = array<i64: 1, 8, 512>}]} {
    %c0 = arith.constant 0 : index
    %c0_0 = arith.constant 0 : index
    %c0_1 = arith.constant 0 : index
    %c0_2 = arith.constant 0 : index
    %0 = vector.load %arg3[%c0, %c0_0, %c0_1, %c0_2] : memref<1x2x8x256xf32, #tpu.memory_space<vmem>>, vector<1x2x8x256xf32>
    %c0_3 = arith.constant 0 : index
    %c0_4 = arith.constant 0 : index
    %c0_5 = arith.constant 0 : index
    %c0_6 = arith.constant 0 : index
    %1 = vector.load %arg2[%c0_3, %c0_4, %c0_5, %c0_6] : memref<3x2x8x1xf32, #tpu.memory_space<vmem>>, vector<3x2x8x1xf32>
    %2 = vector.extract_strided_slice %1 {offsets = [0, 0, 0, 0], sizes = [1, 2, 8, 1], strides = [1, 1, 1, 1]} : vector<3x2x8x1xf32> to vector<1x2x8x1xf32>
    %3 = vector.shape_cast %2 : vector<1x2x8x1xf32> to vector<2x8x1xf32>
    %4 = vector.extract_strided_slice %1 {offsets = [1, 0, 0, 0], sizes = [1, 2, 8, 1], strides = [1, 1, 1, 1]} : vector<3x2x8x1xf32> to vector<1x2x8x1xf32>
    %5 = vector.shape_cast %4 : vector<1x2x8x1xf32> to vector<2x8x1xf32>
    %6 = vector.extract_strided_slice %1 {offsets = [2, 0, 0, 0], sizes = [1, 2, 8, 1], strides = [1, 1, 1, 1]} : vector<3x2x8x1xf32> to vector<1x2x8x1xf32>
    %7 = vector.shape_cast %6 : vector<1x2x8x1xf32> to vector<2x8x1xf32>
    %cst = arith.constant dense<0.000000e+00> : vector<1x2x8xf32>
    %8 = vector.multi_reduction <add>, %0, %cst [3] : vector<1x2x8x256xf32> to vector<1x2x8xf32>
    %9 = vector.shape_cast %8 : vector<1x2x8xf32> to vector<1x2x8x1xf32>
    %cst_7 = arith.constant 2.560000e+02 : f32
    %10 = vector.broadcast %cst_7 : f32 to vector<1x2x8x1xf32>
    %11 = arith.divf %9, %10 : vector<1x2x8x1xf32>
    %12 = arith.mulf %0, %0 : vector<1x2x8x256xf32>
    %cst_8 = arith.constant dense<0.000000e+00> : vector<1x2x8xf32>
    %13 = vector.multi_reduction <add>, %12, %cst_8 [3] : vector<1x2x8x256xf32> to vector<1x2x8xf32>
    %14 = vector.shape_cast %13 : vector<1x2x8xf32> to vector<1x2x8x1xf32>
    %cst_9 = arith.constant 2.560000e+02 : f32
    %15 = vector.broadcast %cst_9 : f32 to vector<1x2x8x1xf32>
    %16 = arith.divf %14, %15 : vector<1x2x8x1xf32>
    %17 = arith.mulf %11, %11 : vector<1x2x8x1xf32>
    %18 = arith.subf %16, %17 : vector<1x2x8x1xf32>
    %cst_10 = arith.constant 0.000000e+00 : f32
    %19 = vector.broadcast %cst_10 : f32 to vector<1x2x8x1xf32>
    %20 = arith.maximumf %18, %19 : vector<1x2x8x1xf32>
    %cst_11 = arith.constant 9.99999974E-6 : f32
    %21 = vector.broadcast %cst_11 : f32 to vector<1x2x8x1xf32>
    %22 = arith.addf %20, %21 : vector<1x2x8x1xf32>
    %23 = math.rsqrt %22 : vector<1x2x8x1xf32>
    %24 = vector.shape_cast %3 : vector<2x8x1xf32> to vector<1x2x8x1xf32>
    %25 = arith.mulf %24, %23 : vector<1x2x8x1xf32>
    %26 = vector.shape_cast %5 : vector<2x8x1xf32> to vector<1x2x8x1xf32>
    %27 = arith.subf %26, %25 : vector<1x2x8x1xf32>
    %28 = arith.mulf %27, %11 : vector<1x2x8x1xf32>
    %29 = vector.shape_cast %7 : vector<2x8x1xf32> to vector<1x2x8x1xf32>
    %30 = arith.addf %28, %29 : vector<1x2x8x1xf32>
    %31 = vector.broadcast %25 : vector<1x2x8x1xf32> to vector<1x2x8x256xf32>
    %32 = arith.mulf %31, %0 : vector<1x2x8x256xf32>
    %33 = vector.broadcast %30 : vector<1x2x8x1xf32> to vector<1x2x8x256xf32>
    %34 = arith.addf %32, %33 : vector<1x2x8x256xf32>
    %cst_12 = arith.constant 5.000000e-01 : f32
    %35 = vector.broadcast %cst_12 : f32 to vector<1x2x8x256xf32>
    %36 = arith.mulf %35, %34 : vector<1x2x8x256xf32>
    %37 = math.tanh %36 : vector<1x2x8x256xf32>
    %cst_13 = arith.constant 5.000000e-01 : f32
    %38 = vector.broadcast %cst_13 : f32 to vector<1x2x8x256xf32>
    %39 = arith.mulf %38, %37 : vector<1x2x8x256xf32>
    %cst_14 = arith.constant 5.000000e-01 : f32
    %40 = vector.broadcast %cst_14 : f32 to vector<1x2x8x256xf32>
    %41 = arith.addf %39, %40 : vector<1x2x8x256xf32>
    %42 = arith.mulf %0, %41 : vector<1x2x8x256xf32>
    %43 = vector.extract_strided_slice %42 {offsets = [0, 0, 0, 0], sizes = [1, 1, 8, 256], strides = [1, 1, 1, 1]} : vector<1x2x8x256xf32> to vector<1x1x8x256xf32>
    %44 = vector.shape_cast %43 : vector<1x1x8x256xf32> to vector<1x8x256xf32>
    %c0_15 = arith.constant 0 : index
    %c0_16 = arith.constant 0 : index
    %c0_17 = arith.constant 0 : index
    %45 = vector.load %arg4[%c0_15, %c0_16, %c0_17] : memref<1x8x512xf32, #tpu.memory_space<vmem>>, vector<1x8x256xf32>
    tpu.vector_store %arg4[%c0_15, %c0_16, %c0_17], %44 {strides = array<i32>} : memref<1x8x512xf32, #tpu.memory_space<vmem>>, vector<1x8x256xf32>,
    %46 = vector.extract_strided_slice %42 {offsets = [0, 1, 0, 0], sizes = [1, 1, 8, 256], strides = [1, 1, 1, 1]} : vector<1x2x8x256xf32> to vector<1x1x8x256xf32>
    %47 = vector.shape_cast %46 : vector<1x1x8x256xf32> to vector<1x8x256xf32>
    %c0_18 = arith.constant 0 : index
    %c0_19 = arith.constant 0 : index
    %c256 = arith.constant 256 : index
    %48 = vector.load %arg4[%c0_18, %c0_19, %c256] : memref<1x8x512xf32, #tpu.memory_space<vmem>>, vector<1x8x256xf32>
    tpu.vector_store %arg4[%c0_18, %c0_19, %c256], %47 {strides = array<i32>} : memref<1x8x512xf32, #tpu.memory_space<vmem>>, vector<1x8x256xf32>,
    return
  }
  func.func @transform_0(%arg0: i32, %arg1: i32) -> (i32, i32, i32, i32) {
    %c0_i32 = arith.constant 0 : i32
    %c0_i32_0 = arith.constant 0 : i32
    %c0_i32_1 = arith.constant 0 : i32
    %c0_i32_2 = arith.constant 0 : i32
    return %c0_i32, %c0_i32_0, %arg0, %c0_i32_1 : i32, i32, i32, i32
  }
  func.func @transform_1(%arg0: i32, %arg1: i32) -> (i32, i32, i32, i32) {
    %c0_i32 = arith.constant 0 : i32
    %c0_i32_0 = arith.constant 0 : i32
    %c0_i32_1 = arith.constant 0 : i32
    return %arg1, %c0_i32, %arg0, %c0_i32_0 : i32, i32, i32, i32
  }
  func.func @transform_2(%arg0: i32, %arg1: i32) -> (i32, i32, i32) {
    %c0_i32 = arith.constant 0 : i32
    %c0_i32_0 = arith.constant 0 : i32
    return %arg1, %arg0, %c0_i32 : i32, i32, i32
  }
}

</mosaic_0001>

<llo_original>
// kernel: sa_layer_pallas.1
$region0: #{sa_layer_pallas.1}
  #allocation0 [shape = 'u32[]', space=smem, size = 0x4, offset = 0x4, fixed_abs, tag = 'smem constant byte address 0x4 - core index']
  #allocation1 [shape = 'u32[72,128]{1,0:T(1,128)}', space=vmem, size = 0x9000, scoped, tag = 'internal scratch']
  %s0 = inlined_call_operand.vmem [shape: f32[3,2,8,1], index: 0, kind: input, shape index: {}]
  %s1 = inlined_call_operand.vmem [shape: f32[2,2,8,256], index: 1, kind: input, shape index: {}]
  %s2 = inlined_call_operand.vmem [shape: f32[2,8,512], index: 2, kind: output, shape index: {}]
  %s3 = sld [smem:[#allocation0]]
  $region41: #{sa_layer_pallas.1} parent=0
    _
  %s5 = ssub.s32 1, %s3
  %s6 = scalar_select 0, %s5, %s3
  loop: start=0, step=1, limit=4
  $region2: #{sa_layer_pallas.1} parent=0 // loop_pre_header
    _
  $region3: #{sa_layer_pallas.1} parent=0 // loop_header
    %s8 = sphi 0, %s12
    %p9 = scmp.ge.s32.totalorder %s8, 4
    %s15 = sphi 0, %s27
    %s16 = sphi 0, %s23
    %s17 = sphi 0, %s15
    %s18 = sphi 0, %s16
    %s19 = sphi 0, %s17
    %s20 = sphi 0, %s18
    %s30 = sphi 0, %s32
    %s33 = sphi 0, %s30
    %s34 = sphi 0, %s33
    %s50 = sphi 0, %s34
    %s58 = sphi 0, %s60
    %s61 = sphi 0, %s58
    %s62 = sphi 0, %s61
    %s78 = sphi 0, %s62
    %s86 = sphi 0, %s88
    %s89 = sphi 0, %s86
    %s90 = sphi 0, %s89
    %s106 = sphi 0, %s90
  $region4: #{sa_layer_pallas.1} parent=0 // loop_header_branch
    %11 = sbr.rel (%p9) target = $region8
  $region5: #{sa_layer_pallas.1} parent=0 // loop_body
    %s13 = ssub.s32 %s8, 1
    %s14 = ssub.s32 %s8, 2
    %s21 = sadd.s32 1, %s16
    %p22 = scmp.ge.s32.totalorder %s21, 2
    %s23 = scalar_select %p22, 0, %s21
    %s24 = sadd.s32 1, %s15
    %s25 = scalar_select %p22, %s24, %s15
    %p26 = scmp.ge.s32.totalorder %s25, 1
    %s27 = scalar_select %p26, 0, %s25
    %s28 = ssub.s32 %s15, %s27
    %p29 = scmp.eq.s32.totalorder %s28, 0
    %s31 = sadd.s32 %s30, 1
    %s32 = scalar_select %p29, %s30, %s31
    %p35 = pneg %p29
    %p36 = scmp.eq.s32.totalorder %s8, 1
    %p37 = por %p35, %p36
    %p38 = scmp.ne.s32.totalorder %s30, %s33
    %p39 = scmp.eq.s32.totalorder %s8, 0
    %p40 = por %p38, %p39
    %p41 = scmp.ne.s32.totalorder %s30, %s33
    %p42 = scmp.eq.s32.totalorder %s13, 1
    %p43 = por %p41, %p42
    %p44 = scmp.ne.s32.totalorder %s33, %s34
    %p45 = scmp.eq.s32.totalorder %s13, 0
    %p46 = por %p44, %p45
    %p47 = scmp.ne.s32.totalorder %s33, %s34
    %p48 = scmp.eq.s32.totalorder %s14, 1
    %p49 = por %p47, %p48
    %p51 = scmp.ne.s32.totalorder %s34, %s50
    %p52 = scmp.eq.s32.totalorder %s14, 0
    %p53 = por %p51, %p52
    %s54 = ssub.s32 %s16, %s23
    %s55 = ssub.s32 %s15, %s27
    %s56 = sor.u32 %s54, %s55
    %p57 = scmp.eq.s32.totalorder %s56, 0
    %s59 = sadd.s32 %s58, 1
    %s60 = scalar_select %p57, %s58, %s59
    %p63 = pneg %p57
    %p64 = scmp.eq.s32.totalorder %s8, 1
    %p65 = por %p63, %p64
    %p66 = scmp.ne.s32.totalorder %s58, %s61
    %p67 = scmp.eq.s32.totalorder %s8, 0
    %p68 = por %p66, %p67
    %p69 = scmp.ne.s32.totalorder %s58, %s61
    %p70 = scmp.eq.s32.totalorder %s13, 1
    %p71 = por %p69, %p70
    %p72 = scmp.ne.s32.totalorder %s61, %s62
    %p73 = scmp.eq.s32.totalorder %s13, 0
    %p74 = por %p72, %p73
    %p75 = scmp.ne.s32.totalorder %s61, %s62
    %p76 = scmp.eq.s32.totalorder %s14, 1
    %p77 = por %p75, %p76
    %p79 = scmp.ne.s32.totalorder %s62, %s78
    %p80 = scmp.eq.s32.totalorder %s14, 0
    %p81 = por %p79, %p80
    %s82 = ssub.s32 %s16, %s23
    %s83 = ssub.s32 %s15, %s27
    %s84 = sor.u32 %s82, %s83
    %p85 = scmp.eq.s32.totalorder %s84, 0
    %s87 = sadd.s32 %s86, 1
    %s88 = scalar_select %p85, %s86, %s87
    %p91 = pneg %p85
    %p92 = scmp.eq.s32.totalorder %s8, 1
    %p93 = por %p91, %p92
    %p94 = scmp.ne.s32.totalorder %s86, %s89
    %p95 = scmp.eq.s32.totalorder %s8, 0
    %p96 = por %p94, %p95
    %p97 = scmp.ne.s32.totalorder %s86, %s89
    %p98 = scmp.eq.s32.totalorder %s13, 1
    %p99 = por %p97, %p98
    %p100 = scmp.ne.s32.totalorder %s89, %s90
    %p101 = scmp.eq.s32.totalorder %s13, 0
    %p102 = por %p100, %p101
    %p103 = scmp.ne.s32.totalorder %s89, %s90
    %p104 = scmp.eq.s32.totalorder %s14, 1
    %p105 = por %p103, %p104
    %p107 = scmp.ne.s32.totalorder %s90, %s106
    %p108 = scmp.eq.s32.totalorder %s14, 0
    %p109 = por %p107, %p108
    %p110 = scmp.le.s32.totalorder 1, %s8
    %p111 = scmp.lt.s32.totalorder %s8, 3
    %p112 = pnand %p110, %p111
    %p113 = pneg %p112
    // Predicated region
    $region9: #{sa_layer_pallas.1} parent=5 // pred_check
      _
    $region10: #{sa_layer_pallas.1} parent=5 // pred_check_branch
      %115 = sbr.rel (%p112) target = $region12
    $region11: #{sa_layer_pallas.1} parent=5 // pred_region
      %s116 = ssub.s32 %s8, 1
      // Predicated region
      $region13: #{sa_layer_pallas.1} parent=11 // pred_check
        %p117 = pneg %p46
      $region14: #{sa_layer_pallas.1} parent=11 // pred_check_branch
        %119 = sbr.rel (%p117) target = $region16
      $region15: #{sa_layer_pallas.1} parent=11 // pred_region
        %p120 = scmp.lt.s32.totalorder %s17, 0
        %s121 = scalar_select %p120, %s17, 0
        %s122 = smul.addr %s121, 8
        %s123 = scalar_lea.vmem %s0, %s122
      $region16: #{sa_layer_pallas.1} parent=11 // pred_fallthru
        _
    $region12: #{sa_layer_pallas.1} parent=5 // pred_fallthru
      _
    %p124 = scmp.lt.s32.totalorder %s8, 2
    // Predicated region
    $region17: #{sa_layer_pallas.1} parent=5 // pred_check
      %p125 = pneg %p124
    $region18: #{sa_layer_pallas.1} parent=5 // pred_check_branch
      %127 = sbr.rel (%p125) target = $region20
    $region19: #{sa_layer_pallas.1} parent=5 // pred_region
      // Predicated region
      $region21: #{sa_layer_pallas.1} parent=19 // pred_check
        %p128 = pneg %p68
      $region22: #{sa_layer_pallas.1} parent=19 // pred_check_branch
        %130 = sbr.rel (%p128) target = $region24
      $region23: #{sa_layer_pallas.1} parent=19 // pred_region
        %p131 = scmp.lt.s32.totalorder %s16, 1
        %s132 = scalar_select %p131, %s16, 1
        %p133 = scmp.lt.s32.totalorder %s15, 0
        %s134 = scalar_select %p133, %s15, 0
        %s135 = smul.addr %s134, 2
        %s136 = smul.addr %s132, 4
        %s137 = sadd.s32 %s135, %s136
        %s138 = smul.addr %s137, 8
        %s139 = scalar_lea.vmem %s1, %s138
      $region24: #{sa_layer_pallas.1} parent=19 // pred_fallthru
        _
    $region20: #{sa_layer_pallas.1} parent=5 // pred_fallthru
      _
    %p140 = scmp.le.s32.totalorder 1, %s8
    %p141 = scmp.lt.s32.totalorder %s8, 3
    %p142 = pnand %p140, %p141
    %p143 = pneg %p142
    // Predicated region
    $region25: #{sa_layer_pallas.1} parent=5 // pred_check
      _
    $region26: #{sa_layer_pallas.1} parent=5 // pred_check_branch
      %145 = sbr.rel (%p142) target = $region28
    $region27: #{sa_layer_pallas.1} parent=5 // pred_region
      %s146 = ssub.s32 %s8, 1
      %p147 = scmp.lt.s32.totalorder %s17, 0
      %s148 = scalar_select %p147, %s17, 0
      %s149 = smul.addr %s148, 8
      %s150 = scalar_lea.vmem %s0, %s149
      %p151 = pneg %p46
      %p152 = pneg %p43
      %p153 = scmp.lt.s32.totalorder %s18, 1
      %s154 = scalar_select %p153, %s18, 1
      %p155 = scmp.lt.s32.totalorder %s17, 0
      %s156 = scalar_select %p155, %s17, 0
      %s157 = smul.addr %s156, 2
      %s158 = smul.addr %s154, 4
      %s159 = sadd.s32 %s157, %s158
      %s160 = smul.addr %s159, 8
      %s161 = scalar_lea.vmem %s1, %s160
      %p162 = pneg %p74
      %p163 = pneg %p71
      %p164 = pneg %p102
      %p165 = pneg %p99
      %p166 = scmp.lt.s32.totalorder %s18, 1
      %s167 = scalar_select %p166, %s18, 1
      %p168 = scmp.lt.s32.totalorder %s17, 0
      %s169 = scalar_select %p168, %s17, 0
      %s170 = smul.addr %s169, 4
      %s171 = smul.addr %s167, 4
      %s172 = sadd.s32 %s170, %s171
      %s173 = smul.addr %s172, 8
      %s174 = scalar_lea.vmem %s2, %s173
      %p175 = scmp.lt.s32.totalorder %s17, 0
      %s176 = scalar_select %p175, %s17, 0
      %s177 = smul.addr %s176, 8
      %s178 = scalar_lea.vmem %s0, %s177
      %p179 = scmp.lt.s32.totalorder %s18, 1
      %s180 = scalar_select %p179, %s18, 1
      %p181 = scmp.lt.s32.totalorder %s17, 0
      %s182 = scalar_select %p181, %s17, 0
      %s183 = smul.addr %s182, 2
      %s184 = smul.addr %s180, 4
      %s185 = sadd.s32 %s183, %s184
      %s186 = smul.addr %s185, 8
      %s187 = scalar_lea.vmem %s1, %s186
      %p188 = scmp.lt.s32.totalorder %s18, 1
      %s189 = scalar_select %p188, %s18, 1
      %p190 = scmp.lt.s32.totalorder %s17, 0
      %s191 = scalar_select %p190, %s17, 0
      %s192 = smul.addr %s191, 4
      %s193 = smul.addr %s189, 4
      %s194 = sadd.s32 %s192, %s193
      %s195 = smul.addr %s194, 8
      %s196 = scalar_lea.vmem %s2, %s195
      %v197 = vld [vmem:[%s187] sm:$0xff]
      %v198 = vld [vmem:[%s187 + $0x8] sm:$0xff]
      %v199 = vld [vmem:[%s187 + $0x10] sm:$0xff]
      %v200 = vld [vmem:[%s187 + $0x18] sm:$0xff]
      %v201 = vld [vmem:[%s178] sm:$0xff]
      %v202 = vld [vmem:[%s178 + $0x8] sm:$0xff]
      %v203 = vld [vmem:[%s178 + $0x10] sm:$0xff]
      %v204 = vld [vmem:[%s178 + $0x18] sm:$0xff]
      %v205 = vld [vmem:[%s178 + $0x20] sm:$0xff]
      %v206 = vld [vmem:[%s178 + $0x28] sm:$0xff]
      %v207 = vadd.f32 %v197, %v198
      %208 = vadd.xlane.f32.xlu0 %v207
      %v209 = vpop.xlane.xlu0 %208
      %v210 = vadd.f32 %v199, %v200
      %211 = vadd.xlane.f32.xlu0 %v210
      %v212 = vpop.xlane.xlu0 %211
      %v213 = vrcp.pop 256.0
      %v214 = vmul.f32 256.0, %v213
      %v215 = vsub.f32 1.0, %v214
      %v216 = vmul.f32 %v213, %v215
      %v217 = vadd.f32 %v213, %v216
      %vm218 = vweird.f32 %v213
      %v219 = vsel %vm218, %v213, %v217
      %v220 = vmul.f32 %v209, %v219
      %v221 = vmul.f32 %v212, %v219
      %v222 = vmul.f32 %v197, %v197
      %v223 = vmul.f32 %v198, %v198
      %v224 = vmul.f32 %v199, %v199
      %v225 = vmul.f32 %v200, %v200
      %v226 = vadd.f32 %v222, %v223
      %227 = vadd.xlane.f32.xlu0 %v226
      %v228 = vpop.xlane.xlu0 %227
      %v229 = vadd.f32 %v224, %v225
      %230 = vadd.xlane.f32.xlu0 %v229
      %v231 = vpop.xlane.xlu0 %230
      %v232 = vmul.f32 %v228, %v219
      %v233 = vmul.f32 %v231, %v219
      %v234 = vmul.f32 %v220, %v220
      %v235 = vmul.f32 %v221, %v221
      %v236 = vsub.f32 %v232, %v234
      %v237 = vsub.f32 %v233, %v235
      %v238 = vmax.f32 %v236, 0.0
      %v239 = vmax.f32 %v237, 0.0
      %v240 = vadd.f32 %v238, 1e-05
      %v241 = vadd.f32 %v239, 1e-05
      %v242 = vrsqrt.pop %v240
      %v243 = vmul.f32 %v242, %v240
      %v244 = vmul.f32 %v243, %v242
      %v245 = vmul.f32 0.5, %v244
      %v246 = vsub.f32 1.5, %v245
      %v247 = vmul.f32 %v242, %v246
      %vm248 = vweird.f32 %v240
      %vm249 = vweird.f32 %v242
      %vm250 = vmor %vm248, %vm249
      %v251 = vsel %vm250, %v242, %v247
      %v252 = vrsqrt.pop %v241
      %v253 = vmul.f32 %v252, %v241
      %v254 = vmul.f32 %v253, %v252
      %v255 = vmul.f32 0.5, %v254
      %v256 = vsub.f32 1.5, %v255
      %v257 = vmul.f32 %v252, %v256
      %vm258 = vweird.f32 %v241
      %vm259 = vweird.f32 %v252
      %vm260 = vmor %vm258, %vm259
      %v261 = vsel %vm260, %v252, %v257
      %v262 = vmul.f32 %v201, %v251
      %v263 = vmul.f32 %v202, %v261
      %v264 = vsub.f32 %v203, %v262
      %v265 = vsub.f32 %v204, %v263
      %v266 = vmul.f32 %v264, %v220
      %v267 = vmul.f32 %v265, %v221
      %v268 = vadd.f32 %v266, %v205
      %v269 = vadd.f32 %v267, %v206
      %271 = vset.pattern.permute.xlu0 0
      %272 = vperm.xlu0 %271, %v262
      %v273 = vpop.permute.xlu0 %272
      %276 = vset.pattern.permute.xlu0 0
      %277 = vperm.xlu0 %276, %v263
      %v278 = vpop.permute.xlu0 %277
      %v280 = vmul.f32 %v273, %v197
      %v281 = vmul.f32 %v273, %v198
      %v282 = vmul.f32 %v278, %v199
      %v283 = vmul.f32 %v278, %v200
      %285 = vset.pattern.permute.xlu0 0
      %286 = vperm.xlu0 %285, %v268
      %v287 = vpop.permute.xlu0 %286
      %290 = vset.pattern.permute.xlu0 0
      %291 = vperm.xlu0 %290, %v269
      %v292 = vpop.permute.xlu0 %291
      %v294 = vadd.f32 %v280, %v287
      %v295 = vadd.f32 %v281, %v287
      %v296 = vadd.f32 %v282, %v292
      %v297 = vadd.f32 %v283, %v292
      %v298 = vmul.f32 %v294, 0.5
      %v299 = vmul.f32 %v295, 0.5
      %v300 = vmul.f32 %v296, 0.5
      %v301 = vmul.f32 %v297, 0.5
      %v302 = vtanh.pop %v298
      %v303 = vtanh.pop %v299
      %v304 = vtanh.pop %v300
      %v305 = vtanh.pop %v301
      %v306 = vmul.f32 %v302, 0.5
      %v307 = vmul.f32 %v303, 0.5
      %v308 = vmul.f32 %v304, 0.5
      %v309 = vmul.f32 %v305, 0.5
      %v310 = vadd.f32 %v306, 0.5
      %v311 = vadd.f32 %v307, 0.5
      %v312 = vadd.f32 %v308, 0.5
      %v313 = vadd.f32 %v309, 0.5
      %v314 = vmul.f32 %v197, %v310
      %v315 = vmul.f32 %v198, %v311
      %v316 = vmul.f32 %v199, %v312
      %v317 = vmul.f32 %v200, %v313
      %318 = vst [vmem:[%s196] sm:$0xff] %v314
      %319 = vst [vmem:[%s196 + $0x8] sm:$0xff] %v315
      %320 = vst [vmem:[%s196 + $0x10] sm:$0xff] %v316
      %321 = vst [vmem:[%s196 + $0x18] sm:$0xff] %v317
      %p322 = scmp.lt.s32.totalorder %s18, 1
      %s323 = scalar_select %p322, %s18, 1
      %p324 = scmp.lt.s32.totalorder %s17, 0
      %s325 = scalar_select %p324, %s17, 0
      %s326 = smul.addr %s325, 4
      %s327 = smul.addr %s323, 4
      %s328 = sadd.s32 %s326, %s327
      %s329 = smul.addr %s328, 8
      %s330 = scalar_lea.vmem %s2, %s329
      // Predicated region
      $region29: #{sa_layer_pallas.1} parent=27 // pred_check
        %p331 = pneg %p99
      $region30: #{sa_layer_pallas.1} parent=27 // pred_check_branch
        %333 = sbr.rel (%p331) target = $region32
      $region31: #{sa_layer_pallas.1} parent=27 // pred_region
        _
      $region32: #{sa_layer_pallas.1} parent=27 // pred_fallthru
        _
    $region28: #{sa_layer_pallas.1} parent=5 // pred_fallthru
      _
    %p334 = scmp.le.s32.totalorder 2, %s8
    // Predicated region
    $region33: #{sa_layer_pallas.1} parent=5 // pred_check
      %p335 = pneg %p334
    $region34: #{sa_layer_pallas.1} parent=5 // pred_check_branch
      %337 = sbr.rel (%p335) target = $region36
    $region35: #{sa_layer_pallas.1} parent=5 // pred_region
      %s338 = ssub.s32 %s8, 2
      // Predicated region
      $region37: #{sa_layer_pallas.1} parent=35 // pred_check
        %p339 = pneg %p105
      $region38: #{sa_layer_pallas.1} parent=35 // pred_check_branch
        %341 = sbr.rel (%p339) target = $region40
      $region39: #{sa_layer_pallas.1} parent=35 // pred_region
        %p342 = scmp.lt.s32.totalorder %s20, 1
        %s343 = scalar_select %p342, %s20, 1
        %p344 = scmp.lt.s32.totalorder %s19, 0
        %s345 = scalar_select %p344, %s19, 0
        %s346 = smul.addr %s345, 4
        %s347 = smul.addr %s343, 4
        %s348 = sadd.s32 %s346, %s347
        %s349 = smul.addr %s348, 8
        %s350 = scalar_lea.vmem %s2, %s349
      $region40: #{sa_layer_pallas.1} parent=35 // pred_fallthru
        _
    $region36: #{sa_layer_pallas.1} parent=5 // pred_fallthru
      _
  $region6: #{sa_layer_pallas.1} parent=0 // loop_footer
    %s12 = sadd.s32 1, %s8
  $region7: #{sa_layer_pallas.1} parent=0 // loop_footer_branch
    %7 = sbr.rel target = $region3
  $region8: #{sa_layer_pallas.1} parent=0 // loop_exit
    _

</llo_original>
